<compile_context>
chip_gen: v7x
topology: tpu7x:2x2x1
jax: 0.10.0
libtpu: 0.0.40
codegen_flags: <defaults>
</compile_context>

<pallas_src>
import functools

import jax
import jax.numpy as jnp
from jax.experimental import pallas as pl
from jax.experimental.pallas import tpu as pltpu

_LANES = 128


def _round_up(x, m):
    return ((x + m - 1) // m) * m


def _cdiv(a, b):
    return -(-a // b)


def _neg_pearson_kernel(preds_ref, labels_ref, out_ref,
                        acc_x, acc_y, acc_xy, acc_x2, acc_y2,
                        *, n_signal, unroll):
    """Grid = (B tiles, N tiles).  N axis is the reduction / accumulator axis."""
    k = pl.program_id(1)

    @pl.when(k == 0)
    def _init():
        acc_x[...] = jnp.zeros_like(acc_x)
        acc_y[...] = jnp.zeros_like(acc_y)
        acc_xy[...] = jnp.zeros_like(acc_xy)
        acc_x2[...] = jnp.zeros_like(acc_x2)
        acc_y2[...] = jnp.zeros_like(acc_y2)

    tn = preds_ref.shape[1]
    n_chunks = tn // _LANES

    # Register-resident lane-wise partials: load the five (tb, 128) running
    # sums once per grid step, accumulate in the fori_loop carry (pure VPU
    # adds/muls), write back once.  Cross-lane (XLU) reductions, the Pearson
    # formula and the EUP rsqrt run only on the last N step.
    def body(c, carry):
        sx, sy, sxy, sx2, sy2 = carry
        off = pl.multiple_of(c * _LANES, _LANES)
        xc = preds_ref[:, pl.ds(off, _LANES)].astype(jnp.float32)
        yc = labels_ref[:, pl.ds(off, _LANES)].astype(jnp.float32)
        return (sx + xc, sy + yc, sxy + xc * yc, sx2 + xc * xc, sy2 + yc * yc)

    carry0 = (acc_x[...], acc_y[...], acc_xy[...], acc_x2[...], acc_y2[...])
    sx, sy, sxy, sx2, sy2 = jax.lax.fori_loop(
        0, n_chunks, body, carry0, unroll=unroll)

    acc_x[...] = sx
    acc_y[...] = sy
    acc_xy[...] = sxy
    acc_x2[...] = sx2
    acc_y2[...] = sy2

    @pl.when(k == pl.num_programs(1) - 1)
    def _finalize():
        n = jnp.float32(n_signal)  # original (unpadded) N, matches preds.shape[1]
        rsx = jnp.sum(sx, axis=1, keepdims=True)     # (tb, 1)
        rsy = jnp.sum(sy, axis=1, keepdims=True)
        rsxy = jnp.sum(sxy, axis=1, keepdims=True)
        rsx2 = jnp.sum(sx2, axis=1, keepdims=True)
        rsy2 = jnp.sum(sy2, axis=1, keepdims=True)

        num = n * rsxy - rsx * rsy
        den2 = (n * rsx2 - rsx * rsx) * (n * rsy2 - rsy * rsy)
        # NOTE: like the PyTorch reference, a constant row gives den2 == 0 and
        # a NaN/Inf pearson -- semantics kept faithful (no epsilon clamp).
        pearson = num * jax.lax.rsqrt(den2)          # EUP rsqrt, not VPU div+sqrt
        out_ref[...] = 1.0 - pearson                 # per-row loss, (tb, 1)


def neg_pearson_loss(preds, labels, *, tb=32, tn=8192):
    """Pallas TPU implementation of Neg_Pearson.forward.

    preds, labels: (B, N) arrays (f32 or bf16). Returns a float32 scalar.
    Defaults (tb=32, tn=8192, f32) give 1 MiB input blocks (4 MiB double
    buffered) and 20 vregs of accumulators -- HBM-streaming-bound on
    v5e / v6e / v7x.
    """
    assert preds.shape == labels.shape and preds.ndim == 2
    B, N = preds.shape
    itemsize = jnp.dtype(preds.dtype).itemsize
    # Sublane granularity: 8 for 4-byte dtypes, 16 for bf16, 32 for int8.
    sub = max(8, 32 // max(itemsize, 1))

    # --- B tile: small enough that 5x(tb,128) f32 accumulators stay register
    # resident, at least one sublane group, and (v7x) leave >=2 blocks along
    # the "parallel" B axis whenever the batch is big enough for two cores.
    tb = _round_up(max(1, min(tb, B)), sub)
    two_core_tb = _round_up(_cdiv(_round_up(B, sub), 2), sub)
    tb = max(sub, min(tb, two_core_tb))
    b_pad = _round_up(B, tb)

    # --- N tile: lane-aligned, close to the requested size, but balanced so
    # the padded columns stay minimal (<= 127 per tile boundary).
    n128 = _round_up(N, _LANES)
    tn_req = max(_LANES, _round_up(min(tn, n128), _LANES))
    k_tiles = _cdiv(n128, tn_req)
    tn = _round_up(_cdiv(n128, k_tiles), _LANES)
    n_pad = k_tiles * tn

    # Zero padding is exact for the sums (padded columns contribute 0); the
    # formula still uses the original N.  Padded rows give NaN pearson and are
    # sliced off before the final mean.
    if (b_pad, n_pad) != (B, N):
        preds = jnp.pad(preds, ((0, b_pad - B), (0, n_pad - N)))
        labels = jnp.pad(labels, ((0, b_pad - B), (0, n_pad - N)))

    grid = (b_pad // tb, n_pad // tn)
    n_chunks = tn // _LANES
    kernel = functools.partial(_neg_pearson_kernel, n_signal=N,
                               unroll=min(8, n_chunks))

    # Double-buffered input blocks + output + scratch, with headroom; keep the
    # explicit limit so v5e's 16 MiB scoped default never caps the block size,
    # and never ask for more than v7x's 64 MiB physical VMEM.
    block_bytes = tb * tn * itemsize
    vmem_needed = 2 * 2 * block_bytes + 5 * tb * _LANES * 4 + 2 * tb * 4
    vmem_limit = min(64 * 1024 * 1024, max(16 * 1024 * 1024, 2 * vmem_needed))

    per_row = pl.pallas_call(
        kernel,
        out_shape=jax.ShapeDtypeStruct((b_pad, 1), jnp.float32),
        grid_spec=pltpu.PrefetchScalarGridSpec(
            num_scalar_prefetch=0,
            grid=grid,
            # Default Buffered(2) is enough for this contiguous stream; sweep
            # pipeline_mode=pl.Buffered(3) only if a profile shows exposed DMA.
            in_specs=[
                pl.BlockSpec((tb, tn), lambda i, k: (i, k)),
                pl.BlockSpec((tb, tn), lambda i, k: (i, k)),
            ],
            out_specs=pl.BlockSpec((tb, 1), lambda i, k: (i, 0)),
            scratch_shapes=[pltpu.VMEM((tb, _LANES), jnp.float32)] * 5,
        ),
        compiler_params=pltpu.CompilerParams(
            dimension_semantics=("parallel", "arbitrary"),
            vmem_limit_bytes=vmem_limit,
        ),
        cost_estimate=pl.CostEstimate(
            flops=8 * b_pad * n_pad,
            transcendentals=b_pad,
            bytes_accessed=2 * b_pad * n_pad * itemsize + 4 * b_pad,
        ),
    )(preds, labels)

    # Drop padded rows (NaN by construction), average over the real batch.
    return jnp.mean(per_row[:B, 0])


def _neg_pearson_ref(preds, labels):
    # Pure-JAX reference mirroring the PyTorch loop semantics.
    n = preds.shape[1]
    preds = preds.astype(jnp.float32)
    labels = labels.astype(jnp.float32)
    sum_x = jnp.sum(preds, axis=1)
    sum_y = jnp.sum(labels, axis=1)
    sum_xy = jnp.sum(preds * labels, axis=1)
    sum_x2 = jnp.sum(preds ** 2, axis=1)
    sum_y2 = jnp.sum(labels ** 2, axis=1)
    pearson = (n * sum_xy - sum_x * sum_y) / jnp.sqrt(
        (n * sum_x2 - sum_x ** 2) * (n * sum_y2 - sum_y ** 2)
    )
    return jnp.mean(1.0 - pearson)


if __name__ == "__main__":
    key = jax.random.PRNGKey(0)
    k1, k2, k3, k4, k5, k6 = jax.random.split(key, 6)

    # Case 1: B not a multiple of 8 (row padding + masking), several N-tiles
    # (cross-tile scratch accumulation / pl.when finalize).
    B, N = 6, 1024
    preds = jax.random.normal(k1, (B, N), dtype=jnp.float32)
    labels = 0.7 * preds + 0.3 * jax.random.normal(k2, (B, N), dtype=jnp.float32)
    loss = jax.block_until_ready(neg_pearson_loss(preds, labels, tb=8, tn=256))
    ref = _neg_pearson_ref(preds, labels)
    assert jnp.allclose(loss, ref, rtol=1e-4, atol=1e-5), (loss, ref)

    # Case 2: multiple B-tiles and N padded to the lane-aligned tile (2 x 3 grid).
    B, N = 10, 640
    preds = jax.random.normal(k3, (B, N), dtype=jnp.float32)
    labels = 0.5 * preds + 0.5 * jax.random.normal(k4, (B, N), dtype=jnp.float32)
    loss = jax.block_until_ready(neg_pearson_loss(preds, labels, tb=8, tn=256))
    ref = _neg_pearson_ref(preds, labels)
    assert jnp.allclose(loss, ref, rtol=1e-4, atol=1e-5), (loss, ref)

    # Case 3: default (large-block) tile selection path, small shapes.
    B, N = 4, 512
    preds = jax.random.normal(k5, (B, N), dtype=jnp.float32)
    labels = 0.2 * preds + 0.8 * jax.random.normal(k6, (B, N), dtype=jnp.float32)
    loss = jax.block_until_ready(neg_pearson_loss(preds, labels))
    ref = _neg_pearson_ref(preds, labels)
    assert jnp.allclose(loss, ref, rtol=1e-4, atol=1e-5), (loss, ref)

    print("KERNEL_OK")
</pallas_src>

<mosaic_0001>
module attributes {stable_mosaic.version = 11 : i64} {
  func.func @_neg_pearson_kernel(%arg0: i32, %arg1: i32, %arg2: memref<8x256xf32, #tpu.memory_space<vmem>>, %arg3: memref<8x256xf32, #tpu.memory_space<vmem>>, %arg4: memref<8x1xf32, #tpu.memory_space<vmem>>, %arg5: memref<8x128xf32, #tpu.memory_space<vmem>>, %arg6: memref<8x128xf32, #tpu.memory_space<vmem>>, %arg7: memref<8x128xf32, #tpu.memory_space<vmem>>, %arg8: memref<8x128xf32, #tpu.memory_space<vmem>>, %arg9: memref<8x128xf32, #tpu.memory_space<vmem>>) attributes {dimension_semantics = [#tpu.dimension_semantics<parallel>, #tpu.dimension_semantics<arbitrary>], iteration_bounds = array<i64: 1, 4>, scalar_prefetch = 0 : i64, scratch_operands = 5 : i64, tpu.core_type = #tpu.core_type<tc>, window_params = [{transform_indices = @transform_0, window_bounds = array<i64: 8, 256>}, {transform_indices = @transform_1, window_bounds = array<i64: 8, 256>}, {transform_indices = @transform_2, window_bounds = array<i64: 8, 1>}]} {
    %c0_i32 = arith.constant 0 : i32
    %0 = arith.cmpi eq, %arg1, %c0_i32 : i32
    %1 = arith.extui %0 : i1 to i32
    %c0_i32_0 = arith.constant 0 : i32
    %2 = arith.cmpi ne, %1, %c0_i32_0 : i32
    scf.if %2 {
      %cst = arith.constant 0.000000e+00 : f32
      %44 = vector.broadcast %cst : f32 to vector<8x128xf32>
      %c0_27 = arith.constant 0 : index
      %c0_28 = arith.constant 0 : index
      %45 = vector.load %arg5[%c0_27, %c0_28] : memref<8x128xf32, #tpu.memory_space<vmem>>, vector<8x128xf32>
      tpu.vector_store %arg5[%c0_27, %c0_28], %44 {strides = array<i32>} : memref<8x128xf32, #tpu.memory_space<vmem>>, vector<8x128xf32>,
      %cst_29 = arith.constant 0.000000e+00 : f32
      %46 = vector.broadcast %cst_29 : f32 to vector<8x128xf32>
      %c0_30 = arith.constant 0 : index
      %c0_31 = arith.constant 0 : index
      %47 = vector.load %arg6[%c0_30, %c0_31] : memref<8x128xf32, #tpu.memory_space<vmem>>, vector<8x128xf32>
      tpu.vector_store %arg6[%c0_30, %c0_31], %46 {strides = array<i32>} : memref<8x128xf32, #tpu.memory_space<vmem>>, vector<8x128xf32>,
      %cst_32 = arith.constant 0.000000e+00 : f32
      %48 = vector.broadcast %cst_32 : f32 to vector<8x128xf32>
      %c0_33 = arith.constant 0 : index
      %c0_34 = arith.constant 0 : index
      %49 = vector.load %arg7[%c0_33, %c0_34] : memref<8x128xf32, #tpu.memory_space<vmem>>, vector<8x128xf32>
      tpu.vector_store %arg7[%c0_33, %c0_34], %48 {strides = array<i32>} : memref<8x128xf32, #tpu.memory_space<vmem>>, vector<8x128xf32>,
      %cst_35 = arith.constant 0.000000e+00 : f32
      %50 = vector.broadcast %cst_35 : f32 to vector<8x128xf32>
      %c0_36 = arith.constant 0 : index
      %c0_37 = arith.constant 0 : index
      %51 = vector.load %arg8[%c0_36, %c0_37] : memref<8x128xf32, #tpu.memory_space<vmem>>, vector<8x128xf32>
      tpu.vector_store %arg8[%c0_36, %c0_37], %50 {strides = array<i32>} : memref<8x128xf32, #tpu.memory_space<vmem>>, vector<8x128xf32>,
      %cst_38 = arith.constant 0.000000e+00 : f32
      %52 = vector.broadcast %cst_38 : f32 to vector<8x128xf32>
      %c0_39 = arith.constant 0 : index
      %c0_40 = arith.constant 0 : index
      %53 = vector.load %arg9[%c0_39, %c0_40] : memref<8x128xf32, #tpu.memory_space<vmem>>, vector<8x128xf32>
      tpu.vector_store %arg9[%c0_39, %c0_40], %52 {strides = array<i32>} : memref<8x128xf32, #tpu.memory_space<vmem>>, vector<8x128xf32>,
    } else {
    }
    %c0 = arith.constant 0 : index
    %c0_1 = arith.constant 0 : index
    %3 = vector.load %arg5[%c0, %c0_1] : memref<8x128xf32, #tpu.memory_space<vmem>>, vector<8x128xf32>
    %c0_2 = arith.constant 0 : index
    %c0_3 = arith.constant 0 : index
    %4 = vector.load %arg6[%c0_2, %c0_3] : memref<8x128xf32, #tpu.memory_space<vmem>>, vector<8x128xf32>
    %c0_4 = arith.constant 0 : index
    %c0_5 = arith.constant 0 : index
    %5 = vector.load %arg7[%c0_4, %c0_5] : memref<8x128xf32, #tpu.memory_space<vmem>>, vector<8x128xf32>
    %c0_6 = arith.constant 0 : index
    %c0_7 = arith.constant 0 : index
    %6 = vector.load %arg8[%c0_6, %c0_7] : memref<8x128xf32, #tpu.memory_space<vmem>>, vector<8x128xf32>
    %c0_8 = arith.constant 0 : index
    %c0_9 = arith.constant 0 : index
    %7 = vector.load %arg9[%c0_8, %c0_9] : memref<8x128xf32, #tpu.memory_space<vmem>>, vector<8x128xf32>
    %c0_i32_10 = arith.constant 0 : i32
    %c128_i32 = arith.constant 128 : i32
    %8 = arith.muli %c0_i32_10, %c128_i32 : i32
    %9 = tpu.assume_multiple %8, 128 : i32
    %c0_11 = arith.constant 0 : index
    %10 = arith.index_cast %9 : i32 to index
    %11 = vector.load %arg2[%c0_11, %10] : memref<8x256xf32, #tpu.memory_space<vmem>>, vector<8x128xf32>
    %c0_12 = arith.constant 0 : index
    %12 = arith.index_cast %9 : i32 to index
    %13 = vector.load %arg3[%c0_12, %12] : memref<8x256xf32, #tpu.memory_space<vmem>>, vector<8x128xf32>
    %14 = arith.addf %3, %11 : vector<8x128xf32>
    %15 = arith.addf %4, %13 : vector<8x128xf32>
    %16 = arith.mulf %11, %13 : vector<8x128xf32>
    %17 = arith.addf %5, %16 : vector<8x128xf32>
    %18 = arith.mulf %11, %11 : vector<8x128xf32>
    %19 = arith.addf %6, %18 : vector<8x128xf32>
    %20 = arith.mulf %13, %13 : vector<8x128xf32>
    %21 = arith.addf %7, %20 : vector<8x128xf32>
    %c1_i32 = arith.constant 1 : i32
    %c128_i32_13 = arith.constant 128 : i32
    %22 = arith.muli %c1_i32, %c128_i32_13 : i32
    %23 = tpu.assume_multiple %22, 128 : i32
    %c0_14 = arith.constant 0 : index
    %24 = arith.index_cast %23 : i32 to index
    %25 = vector.load %arg2[%c0_14, %24] : memref<8x256xf32, #tpu.memory_space<vmem>>, vector<8x128xf32>
    %c0_15 = arith.constant 0 : index
    %26 = arith.index_cast %23 : i32 to index
    %27 = vector.load %arg3[%c0_15, %26] : memref<8x256xf32, #tpu.memory_space<vmem>>, vector<8x128xf32>
    %28 = arith.addf %14, %25 : vector<8x128xf32>
    %29 = arith.addf %15, %27 : vector<8x128xf32>
    %30 = arith.mulf %25, %27 : vector<8x128xf32>
    %31 = arith.addf %17, %30 : vector<8x128xf32>
    %32 = arith.mulf %25, %25 : vector<8x128xf32>
    %33 = arith.addf %19, %32 : vector<8x128xf32>
    %34 = arith.mulf %27, %27 : vector<8x128xf32>
    %35 = arith.addf %21, %34 : vector<8x128xf32>
    %c2_i32 = arith.constant 2 : i32
    %c0_16 = arith.constant 0 : index
    %c0_17 = arith.constant 0 : index
    %36 = vector.load %arg5[%c0_16, %c0_17] : memref<8x128xf32, #tpu.memory_space<vmem>>, vector<8x128xf32>
    tpu.vector_store %arg5[%c0_16, %c0_17], %28 {strides = array<i32>} : memref<8x128xf32, #tpu.memory_space<vmem>>, vector<8x128xf32>,
    %c0_18 = arith.constant 0 : index
    %c0_19 = arith.constant 0 : index
    %37 = vector.load %arg6[%c0_18, %c0_19] : memref<8x128xf32, #tpu.memory_space<vmem>>, vector<8x128xf32>
    tpu.vector_store %arg6[%c0_18, %c0_19], %29 {strides = array<i32>} : memref<8x128xf32, #tpu.memory_space<vmem>>, vector<8x128xf32>,
    %c0_20 = arith.constant 0 : index
    %c0_21 = arith.constant 0 : index
    %38 = vector.load %arg7[%c0_20, %c0_21] : memref<8x128xf32, #tpu.memory_space<vmem>>, vector<8x128xf32>
    tpu.vector_store %arg7[%c0_20, %c0_21], %31 {strides = array<i32>} : memref<8x128xf32, #tpu.memory_space<vmem>>, vector<8x128xf32>,
    %c0_22 = arith.constant 0 : index
    %c0_23 = arith.constant 0 : index
    %39 = vector.load %arg8[%c0_22, %c0_23] : memref<8x128xf32, #tpu.memory_space<vmem>>, vector<8x128xf32>
    tpu.vector_store %arg8[%c0_22, %c0_23], %33 {strides = array<i32>} : memref<8x128xf32, #tpu.memory_space<vmem>>, vector<8x128xf32>,
    %c0_24 = arith.constant 0 : index
    %c0_25 = arith.constant 0 : index
    %40 = vector.load %arg9[%c0_24, %c0_25] : memref<8x128xf32, #tpu.memory_space<vmem>>, vector<8x128xf32>
    tpu.vector_store %arg9[%c0_24, %c0_25], %35 {strides = array<i32>} : memref<8x128xf32, #tpu.memory_space<vmem>>, vector<8x128xf32>,
    %c3_i32 = arith.constant 3 : i32
    %41 = arith.cmpi eq, %arg1, %c3_i32 : i32
    %42 = arith.extui %41 : i1 to i32
    %c0_i32_26 = arith.constant 0 : i32
    %43 = arith.cmpi ne, %42, %c0_i32_26 : i32
    scf.if %43 {
      %cst = arith.constant dense<0.000000e+00> : vector<8xf32>
      %44 = vector.multi_reduction <add>, %28, %cst [1] : vector<8x128xf32> to vector<8xf32>
      %45 = vector.shape_cast %44 : vector<8xf32> to vector<8x1xf32>
      %cst_27 = arith.constant dense<0.000000e+00> : vector<8xf32>
      %46 = vector.multi_reduction <add>, %29, %cst_27 [1] : vector<8x128xf32> to vector<8xf32>
      %47 = vector.shape_cast %46 : vector<8xf32> to vector<8x1xf32>
      %cst_28 = arith.constant dense<0.000000e+00> : vector<8xf32>
      %48 = vector.multi_reduction <add>, %31, %cst_28 [1] : vector<8x128xf32> to vector<8xf32>
      %49 = vector.shape_cast %48 : vector<8xf32> to vector<8x1xf32>
      %cst_29 = arith.constant dense<0.000000e+00> : vector<8xf32>
      %50 = vector.multi_reduction <add>, %33, %cst_29 [1] : vector<8x128xf32> to vector<8xf32>
      %51 = vector.shape_cast %50 : vector<8xf32> to vector<8x1xf32>
      %cst_30 = arith.constant dense<0.000000e+00> : vector<8xf32>
      %52 = vector.multi_reduction <add>, %35, %cst_30 [1] : vector<8x128xf32> to vector<8xf32>
      %53 = vector.shape_cast %52 : vector<8xf32> to vector<8x1xf32>
      %cst_31 = arith.constant 1.024000e+03 : f32
      %54 = vector.broadcast %cst_31 : f32 to vector<8x1xf32>
      %55 = arith.mulf %54, %49 : vector<8x1xf32>
      %56 = arith.mulf %45, %47 : vector<8x1xf32>
      %57 = arith.subf %55, %56 : vector<8x1xf32>
      %cst_32 = arith.constant 1.024000e+03 : f32
      %58 = vector.broadcast %cst_32 : f32 to vector<8x1xf32>
      %59 = arith.mulf %58, %51 : vector<8x1xf32>
      %60 = arith.mulf %45, %45 : vector<8x1xf32>
      %61 = arith.subf %59, %60 : vector<8x1xf32>
      %cst_33 = arith.constant 1.024000e+03 : f32
      %62 = vector.broadcast %cst_33 : f32 to vector<8x1xf32>
      %63 = arith.mulf %62, %53 : vector<8x1xf32>
      %64 = arith.mulf %47, %47 : vector<8x1xf32>
      %65 = arith.subf %63, %64 : vector<8x1xf32>
      %66 = arith.mulf %61, %65 : vector<8x1xf32>
      %67 = math.rsqrt %66 : vector<8x1xf32>
      %68 = arith.mulf %57, %67 : vector<8x1xf32>
      %cst_34 = arith.constant 1.000000e+00 : f32
      %69 = vector.broadcast %cst_34 : f32 to vector<8x1xf32>
      %70 = arith.subf %69, %68 : vector<8x1xf32>
      %c0_35 = arith.constant 0 : index
      %c0_36 = arith.constant 0 : index
      %71 = vector.load %arg4[%c0_35, %c0_36] : memref<8x1xf32, #tpu.memory_space<vmem>>, vector<8x1xf32>
      tpu.vector_store %arg4[%c0_35, %c0_36], %70 {strides = array<i32>} : memref<8x1xf32, #tpu.memory_space<vmem>>, vector<8x1xf32>,
    } else {
    }
    return
  }
  func.func @transform_0(%arg0: i32, %arg1: i32) -> (i32, i32) {
    %c0_i32 = arith.constant 0 : i32
    return %arg0, %arg1 : i32, i32
  }
  func.func @transform_1(%arg0: i32, %arg1: i32) -> (i32, i32) {
    %c0_i32 = arith.constant 0 : i32
    return %arg0, %arg1 : i32, i32
  }
  func.func @transform_2(%arg0: i32, %arg1: i32) -> (i32, i32) {
    %c0_i32 = arith.constant 0 : i32
    %c0_i32_0 = arith.constant 0 : i32
    return %arg0, %c0_i32 : i32, i32
  }
}

</mosaic_0001>

<llo_original>
// kernel: tpu_custom_call.1
$region0: #{tpu_custom_call.1}
  #allocation0 [shape = 'u32[]', space=smem, size = 0x4, offset = 0x4, fixed_abs, tag = 'smem constant byte address 0x4 - core index']
  #allocation1 [shape = 'u32[144,128]{1,0:T(1,128)}', space=vmem, size = 0x12000, scoped, tag = 'internal scratch']
  #allocation2 [shape = 'f32[8,128]{1,0:T(8,128)}', space=vmem, size = 0x1000, scoped, tag = 'scratch operand']
  #allocation3 [shape = 'f32[8,128]{1,0:T(8,128)}', space=vmem, size = 0x1000, scoped, tag = 'scratch operand']
  #allocation4 [shape = 'f32[8,128]{1,0:T(8,128)}', space=vmem, size = 0x1000, scoped, tag = 'scratch operand']
  #allocation5 [shape = 'f32[8,128]{1,0:T(8,128)}', space=vmem, size = 0x1000, scoped, tag = 'scratch operand']
  #allocation6 [shape = 'f32[8,128]{1,0:T(8,128)}', space=vmem, size = 0x1000, scoped, tag = 'scratch operand']
  %s0 = inlined_call_operand.hbm [shape: f32[8,1024], index: 0, kind: input, shape index: {}]
  %s1 = inlined_call_operand.hbm [shape: f32[8,1024], index: 1, kind: input, shape index: {}]
  %s2 = inlined_call_operand.vmem [shape: f32[8,1], index: 2, kind: output, shape index: {}]
  %s3 = sld [smem:[#allocation0]]
  $region57: #{tpu_custom_call.1} parent=0
    _
  %s5 = ssub.s32 1, %s3
  %s6 = scalar_select 0, %s5, %s3
  $region1: #{tpu_custom_call.1} parent=0
    #allocation7 [shape = 'u8[16384]{0}', space=vmem, size = 0x4000, scoped, tag = 'input window, operand 0']
    #allocation8 [shape = 's32[2]{0}', space=sflag, size = 0x8, scoped, tag = 'scoped memory for tpu_custom_call.1']
    #allocation9 [shape = 'u8[16384]{0}', space=vmem, size = 0x4000, scoped, tag = 'input window, operand 1']
    #allocation10 [shape = 's32[2]{0}', space=sflag, size = 0x8, scoped, tag = 'scoped memory for tpu_custom_call.1']
    %7 = vsyncpa [#allocation8], 0
    %s8 = scalar_lea.sflag [#allocation8], 1
    %9 = vsyncpa %s8, 0
    %10 = vsyncpa [#allocation10], 0
    %s11 = scalar_lea.sflag [#allocation10], 1
    %12 = vsyncpa %s11, 0
    loop: start=0, step=1, limit=6
    $region2: #{tpu_custom_call.1} parent=1 // loop_pre_header
      _
    $region3: #{tpu_custom_call.1} parent=1 // loop_header
      %s14 = sphi 0, %s18
      %p15 = scmp.ge.s32.totalorder %s14, 6
      %s21 = sphi 0, %s33
      %s22 = sphi 0, %s29
      %s23 = sphi 0, %s21
      %s24 = sphi 0, %s22
      %s25 = sphi 0, %s23
      %s26 = sphi 0, %s24
      %s38 = sphi 0, %s40
      %s41 = sphi 0, %s38
      %s42 = sphi 0, %s41
      %s58 = sphi 0, %s42
      %s66 = sphi 0, %s68
      %s69 = sphi 0, %s66
      %s70 = sphi 0, %s69
      %s86 = sphi 0, %s70
      %s92 = sphi 0, %s94
      %s95 = sphi 0, %s92
      %s96 = sphi 0, %s95
      %s112 = sphi 0, %s96
    $region4: #{tpu_custom_call.1} parent=1 // loop_header_branch
      %17 = sbr.rel (%p15) target = $region8
    $region5: #{tpu_custom_call.1} parent=1 // loop_body
      %s19 = ssub.s32 %s14, 1
      %s20 = ssub.s32 %s14, 2
      %s27 = sadd.s32 1, %s22
      %p28 = scmp.ge.s32.totalorder %s27, 4
      %s29 = scalar_select %p28, 0, %s27
      %s30 = sadd.s32 1, %s21
      %s31 = scalar_select %p28, %s30, %s21
      %p32 = scmp.ge.s32.totalorder %s31, 1
      %s33 = scalar_select %p32, 0, %s31
      %s34 = ssub.s32 %s21, %s33
      %s35 = ssub.s32 %s22, %s29
      %s36 = sor.u32 %s34, %s35
      %p37 = scmp.eq.s32.totalorder %s36, 0
      %s39 = sadd.s32 %s38, 1
      %s40 = scalar_select %p37, %s38, %s39
      %p43 = pneg %p37
      %p44 = scmp.eq.s32.totalorder %s14, 3
      %p45 = por %p43, %p44
      %p46 = scmp.ne.s32.totalorder %s38, %s41
      %p47 = scmp.eq.s32.totalorder %s14, 0
      %p48 = por %p46, %p47
      %p49 = scmp.ne.s32.totalorder %s38, %s41
      %p50 = scmp.eq.s32.totalorder %s19, 3
      %p51 = por %p49, %p50
      %p52 = scmp.ne.s32.totalorder %s41, %s42
      %p53 = scmp.eq.s32.totalorder %s19, 0
      %p54 = por %p52, %p53
      %p55 = scmp.ne.s32.totalorder %s41, %s42
      %p56 = scmp.eq.s32.totalorder %s20, 3
      %p57 = por %p55, %p56
      %p59 = scmp.ne.s32.totalorder %s42, %s58
      %p60 = scmp.eq.s32.totalorder %s20, 0
      %p61 = por %p59, %p60
      %s62 = ssub.s32 %s21, %s33
      %s63 = ssub.s32 %s22, %s29
      %s64 = sor.u32 %s62, %s63
      %p65 = scmp.eq.s32.totalorder %s64, 0
      %s67 = sadd.s32 %s66, 1
      %s68 = scalar_select %p65, %s66, %s67
      %p71 = pneg %p65
      %p72 = scmp.eq.s32.totalorder %s14, 3
      %p73 = por %p71, %p72
      %p74 = scmp.ne.s32.totalorder %s66, %s69
      %p75 = scmp.eq.s32.totalorder %s14, 0
      %p76 = por %p74, %p75
      %p77 = scmp.ne.s32.totalorder %s66, %s69
      %p78 = scmp.eq.s32.totalorder %s19, 3
      %p79 = por %p77, %p78
      %p80 = scmp.ne.s32.totalorder %s69, %s70
      %p81 = scmp.eq.s32.totalorder %s19, 0
      %p82 = por %p80, %p81
      %p83 = scmp.ne.s32.totalorder %s69, %s70
      %p84 = scmp.eq.s32.totalorder %s20, 3
      %p85 = por %p83, %p84
      %p87 = scmp.ne.s32.totalorder %s70, %s86
      %p88 = scmp.eq.s32.totalorder %s20, 0
      %p89 = por %p87, %p88
      %s90 = ssub.s32 %s21, %s33
      %p91 = scmp.eq.s32.totalorder %s90, 0
      %s93 = sadd.s32 %s92, 1
      %s94 = scalar_select %p91, %s92, %s93
      %p97 = pneg %p91
      %p98 = scmp.eq.s32.totalorder %s14, 3
      %p99 = por %p97, %p98
      %p100 = scmp.ne.s32.totalorder %s92, %s95
      %p101 = scmp.eq.s32.totalorder %s14, 0
      %p102 = por %p100, %p101
      %p103 = scmp.ne.s32.totalorder %s92, %s95
      %p104 = scmp.eq.s32.totalorder %s19, 3
      %p105 = por %p103, %p104
      %p106 = scmp.ne.s32.totalorder %s95, %s96
      %p107 = scmp.eq.s32.totalorder %s19, 0
      %p108 = por %p106, %p107
      %p109 = scmp.ne.s32.totalorder %s95, %s96
      %p110 = scmp.eq.s32.totalorder %s20, 3
      %p111 = por %p109, %p110
      %p113 = scmp.ne.s32.totalorder %s96, %s112
      %p114 = scmp.eq.s32.totalorder %s20, 0
      %p115 = por %p113, %p114
      %p116 = scmp.le.s32.totalorder 1, %s14
      %p117 = scmp.lt.s32.totalorder %s14, 5
      %p118 = pnand %p116, %p117
      %p119 = pneg %p118
      // Predicated region
      $region9: #{tpu_custom_call.1} parent=5 // pred_check
        _
      $region10: #{tpu_custom_call.1} parent=5 // pred_check_branch
        %121 = sbr.rel (%p118) target = $region12
      $region11: #{tpu_custom_call.1} parent=5 // pred_region
        %s122 = ssub.s32 %s14, 1
      $region12: #{tpu_custom_call.1} parent=5 // pred_fallthru
        _
      %p123 = scmp.lt.s32.totalorder %s14, 4
      // Predicated region
      $region13: #{tpu_custom_call.1} parent=5 // pred_check
        %p124 = pneg %p123
      $region14: #{tpu_custom_call.1} parent=5 // pred_check_branch
        %126 = sbr.rel (%p124) target = $region16
      $region15: #{tpu_custom_call.1} parent=5 // pred_region
        // Predicated region
        $region17: #{tpu_custom_call.1} parent=15 // pred_check
          %p127 = pneg %p48
        $region18: #{tpu_custom_call.1} parent=15 // pred_check_branch
          %129 = sbr.rel (%p127) target = $region20
        $region19: #{tpu_custom_call.1} parent=15 // pred_region
          %s130 = sand.u32 %s38, 1
          %s131 = scalar_lea.sflag [#allocation8], %s130
          %s132 = sand.u32 %s38, 1
          %s133 = smul.addr %s132, 16
          %s134 = scalar_lea.vmem [#allocation7], %s133
          %s135 = smul.u32 2, %s22
          %s137 = ssub.s32 256, 256
          %138 = vsyncadd %s131, %s137
          %s139 = smul.addr %s21, 8
          %s140 = sadd.s32 %s135, %s139
          %s141 = smul.addr %s140, 128
          %s142 = scalar_lea.hbm %s0, %s141
          %s144 = sshll.u32 %s134, 4
          %s145 = int_to_ptr.vmem [resolvable:$true] %s144
          %147 = dma.hbm_to_vmem [thread:$0]  %s142, 256, %s145, %s131
        $region20: #{tpu_custom_call.1} parent=15 // pred_fallthru
          _
        // Predicated region
        $region21: #{tpu_custom_call.1} parent=15 // pred_check
          %p148 = pneg %p76
        $region22: #{tpu_custom_call.1} parent=15 // pred_check_branch
          %150 = sbr.rel (%p148) target = $region24
        $region23: #{tpu_custom_call.1} parent=15 // pred_region
          %s151 = sand.u32 %s66, 1
          %s152 = scalar_lea.sflag [#allocation10], %s151
          %s153 = sand.u32 %s66, 1
          %s154 = smul.addr %s153, 16
          %s155 = scalar_lea.vmem [#allocation9], %s154
          %s156 = smul.u32 2, %s22
          %s158 = ssub.s32 256, 256
          %159 = vsyncadd %s152, %s158
          %s160 = smul.addr %s21, 8
          %s161 = sadd.s32 %s156, %s160
          %s162 = smul.addr %s161, 128
          %s163 = scalar_lea.hbm %s1, %s162
          %s165 = sshll.u32 %s155, 4
          %s166 = int_to_ptr.vmem [resolvable:$true] %s165
          %168 = dma.hbm_to_vmem [thread:$0]  %s163, 256, %s166, %s152
        $region24: #{tpu_custom_call.1} parent=15 // pred_fallthru
          _
      $region16: #{tpu_custom_call.1} parent=5 // pred_fallthru
        _
      %p169 = scmp.le.s32.totalorder 1, %s14
      %p170 = scmp.lt.s32.totalorder %s14, 5
      %p171 = pnand %p169, %p170
      %p172 = pneg %p171
      // Predicated region
      $region25: #{tpu_custom_call.1} parent=5 // pred_check
        _
      $region26: #{tpu_custom_call.1} parent=5 // pred_check_branch
        %174 = sbr.rel (%p171) target = $region28
      $region27: #{tpu_custom_call.1} parent=5 // pred_region
        %s175 = ssub.s32 %s14, 1
        %s176 = sand.u32 %s41, 1
        %s177 = scalar_lea.sflag [#allocation8], %s176
        %s178 = sand.u32 %s41, 1
        %s179 = smul.addr %s178, 16
        %s180 = scalar_lea.vmem [#allocation7], %s179
        // Predicated region
        $region29: #{tpu_custom_call.1} parent=27 // pred_check
          %p181 = pneg %p54
        $region30: #{tpu_custom_call.1} parent=27 // pred_check_branch
          %183 = sbr.rel (%p181) target = $region32
        $region31: #{tpu_custom_call.1} parent=27 // pred_region
          %184 = dma.done %s177, 256
        $region32: #{tpu_custom_call.1} parent=27 // pred_fallthru
          _
        %s185 = sand.u32 %s69, 1
        %s186 = scalar_lea.sflag [#allocation10], %s185
        %s187 = sand.u32 %s69, 1
        %s188 = smul.addr %s187, 16
        %s189 = scalar_lea.vmem [#allocation9], %s188
        // Predicated region
        $region33: #{tpu_custom_call.1} parent=27 // pred_check
          %p190 = pneg %p82
        $region34: #{tpu_custom_call.1} parent=27 // pred_check_branch
          %192 = sbr.rel (%p190) target = $region36
        $region35: #{tpu_custom_call.1} parent=27 // pred_region
          %193 = dma.done %s186, 256
        $region36: #{tpu_custom_call.1} parent=27 // pred_fallthru
          _
        %s194 = sand.u32 %s41, 1
        %s195 = scalar_lea.sflag [#allocation8], %s194
        %s196 = sand.u32 %s41, 1
        %s197 = smul.addr %s196, 16
        %s198 = scalar_lea.vmem [#allocation7], %s197
        %p199 = pneg %p54
        %p200 = pneg %p51
        %s201 = sand.u32 %s69, 1
        %s202 = scalar_lea.sflag [#allocation10], %s201
        %s203 = sand.u32 %s69, 1
        %s204 = smul.addr %s203, 16
        %s205 = scalar_lea.vmem [#allocation9], %s204
        %p206 = pneg %p82
        %p207 = pneg %p79
        %p208 = pneg %p108
        %p209 = pneg %p105
        %p210 = scmp.lt.s32.totalorder %s23, 0
        %s211 = scalar_select %p210, %s23, 0
        %s212 = smul.addr %s211, 8
        %s213 = scalar_lea.vmem %s2, %s212
        %s214 = smul.u32 2, %s24
        %s215 = smul.u32 2, %s24
        %p216 = scmp.lt.s32.totalorder %s23, 0
        %s217 = scalar_select %p216, %s23, 0
        %s218 = smul.addr %s217, 8
        %s219 = scalar_lea.vmem %s2, %s218
        %p220 = scmp.eq.s32.totalorder %s24, 0
        // Predicated region
        $region37: #{tpu_custom_call.1} parent=27 // pred_check
          %p221 = pneg %p220
        $region38: #{tpu_custom_call.1} parent=27 // pred_check_branch
          %223 = sbr.rel (%p221) target = $region40
        $region39: #{tpu_custom_call.1} parent=27 // pred_region
          %224 = vst [vmem:[#allocation2] sm:$0xff] 0.0
          %225 = vst [vmem:[#allocation3] sm:$0xff] 0.0
          %226 = vst [vmem:[#allocation4] sm:$0xff] 0.0
          %227 = vst [vmem:[#allocation5] sm:$0xff] 0.0
          %228 = vst [vmem:[#allocation6] sm:$0xff] 0.0
        $region40: #{tpu_custom_call.1} parent=27 // pred_fallthru
          _
        %v229 = vld [vmem:[#allocation2] sm:$0xff]
        %v230 = vld [vmem:[#allocation3] sm:$0xff]
        %v231 = vld [vmem:[#allocation4] sm:$0xff]
        %v232 = vld [vmem:[#allocation5] sm:$0xff]
        %v233 = vld [vmem:[#allocation6] sm:$0xff]
        %v234 = vld [vmem:[%s180] sm:$0xff]
        %v235 = vld [vmem:[%s189] sm:$0xff]
        %v236 = vadd.f32 %v229, %v234
        %v237 = vadd.f32 %v230, %v235
        %v238 = vmul.f32 %v234, %v235
        %v239 = vadd.f32 %v231, %v238
        %v240 = vmul.f32 %v234, %v234
        %v241 = vadd.f32 %v232, %v240
        %v242 = vmul.f32 %v235, %v235
        %v243 = vadd.f32 %v233, %v242
        %s244 = scalar_lea.vmem %s180, 8 [#allocation7]
        %v245 = vld [vmem:[%s244] sm:$0xff]
        %s246 = scalar_lea.vmem %s189, 8 [#allocation9]
        %v247 = vld [vmem:[%s246] sm:$0xff]
        %v248 = vadd.f32 %v236, %v245
        %v249 = vadd.f32 %v237, %v247
        %v250 = vmul.f32 %v245, %v247
        %v251 = vadd.f32 %v239, %v250
        %v252 = vmul.f32 %v245, %v245
        %v253 = vadd.f32 %v241, %v252
        %v254 = vmul.f32 %v247, %v247
        %v255 = vadd.f32 %v243, %v254
        %256 = vst [vmem:[#allocation2] sm:$0xff] %v248
        %257 = vst [vmem:[#allocation3] sm:$0xff] %v249
        %258 = vst [vmem:[#allocation4] sm:$0xff] %v251
        %259 = vst [vmem:[#allocation5] sm:$0xff] %v253
        %260 = vst [vmem:[#allocation6] sm:$0xff] %v255
        %p261 = scmp.eq.s32.totalorder %s24, 3
        // Predicated region
        $region41: #{tpu_custom_call.1} parent=27 // pred_check
          %p262 = pneg %p261
        $region42: #{tpu_custom_call.1} parent=27 // pred_check_branch
          %264 = sbr.rel (%p262) target = $region44
        $region43: #{tpu_custom_call.1} parent=27 // pred_region
          %265 = vadd.xlane.f32.xlu0 %v248
          %v266 = vpop.xlane.xlu0 %265
          %267 = vadd.xlane.f32.xlu0 %v249
          %v268 = vpop.xlane.xlu0 %267
          %269 = vadd.xlane.f32.xlu0 %v251
          %v270 = vpop.xlane.xlu0 %269
          %271 = vadd.xlane.f32.xlu0 %v253
          %v272 = vpop.xlane.xlu0 %271
          %273 = vadd.xlane.f32.xlu0 %v255
          %v274 = vpop.xlane.xlu0 %273
          %v275 = vmul.f32 %v270, 1024.0
          %v276 = vmul.f32 %v266, %v268
          %v277 = vsub.f32 %v275, %v276
          %v278 = vmul.f32 %v272, 1024.0
          %v279 = vmul.f32 %v266, %v266
          %v280 = vsub.f32 %v278, %v279
          %v281 = vmul.f32 %v274, 1024.0
          %v282 = vmul.f32 %v268, %v268
          %v283 = vsub.f32 %v281, %v282
          %v284 = vmul.f32 %v280, %v283
          %v285 = vrsqrt.pop %v284
          %v286 = vmul.f32 %v277, %v285
          %v287 = vsub.f32 1.0, %v286
          %vm288 = vcmask 7168
          %289 = vst.msk [vmem:[%s219] sm:$0xff] %vm288, %v287
        $region44: #{tpu_custom_call.1} parent=27 // pred_fallthru
          _
        %p290 = scmp.lt.s32.totalorder %s23, 0
        %s291 = scalar_select %p290, %s23, 0
        %s292 = smul.addr %s291, 8
        %s293 = scalar_lea.vmem %s2, %s292
        // Predicated region
        $region45: #{tpu_custom_call.1} parent=27 // pred_check
          %p294 = pneg %p105
        $region46: #{tpu_custom_call.1} parent=27 // pred_check_branch
          %296 = sbr.rel (%p294) target = $region48
        $region47: #{tpu_custom_call.1} parent=27 // pred_region
          _
        $region48: #{tpu_custom_call.1} parent=27 // pred_fallthru
          _
        // Predicated region
        $region49: #{tpu_custom_call.1} parent=27 // pred_check
          %p297 = pneg %p105
        $region50: #{tpu_custom_call.1} parent=27 // pred_check_branch
          %299 = sbr.rel (%p297) target = $region52
        $region51: #{tpu_custom_call.1} parent=27 // pred_region
          %p300 = scmp.lt.s32.totalorder %s23, 0
          %s301 = scalar_select %p300, %s23, 0
          %s302 = smul.addr %s301, 8
          %s303 = scalar_lea.vmem %s2, %s302
        $region52: #{tpu_custom_call.1} parent=27 // pred_fallthru
          _
      $region28: #{tpu_custom_call.1} parent=5 // pred_fallthru
        _
      %p304 = scmp.le.s32.totalorder 2, %s14
      // Predicated region
      $region53: #{tpu_custom_call.1} parent=5 // pred_check
        %p305 = pneg %p304
      $region54: #{tpu_custom_call.1} parent=5 // pred_check_branch
        %307 = sbr.rel (%p305) target = $region56
      $region55: #{tpu_custom_call.1} parent=5 // pred_region
        %s308 = ssub.s32 %s14, 2
      $region56: #{tpu_custom_call.1} parent=5 // pred_fallthru
        _
    $region6: #{tpu_custom_call.1} parent=1 // loop_footer
      %s18 = sadd.s32 1, %s14
    $region7: #{tpu_custom_call.1} parent=1 // loop_footer_branch
      %13 = sbr.rel target = $region3
    $region8: #{tpu_custom_call.1} parent=1 // loop_exit
      _
    %309 = vsyncpa [#allocation8], 1
    %s310 = scalar_lea.sflag [#allocation8], 1
    %311 = vsyncpa %s310, 1
    %312 = vsyncpa [#allocation10], 1
    %s313 = scalar_lea.sflag [#allocation10], 1
    %314 = vsyncpa %s313, 1

</llo_original>
